<compile_context>
chip_gen: v5e
topology: v5e:2x2
jax: 0.10.0
libtpu: 0.0.40
codegen_flags: <defaults>
</compile_context>

<pallas_src>
import functools

import jax
import jax.numpy as jnp
from jax.experimental import pallas as pl
from jax.experimental.pallas import tpu as pltpu


def _round_up(x, m):
    return ((x + m - 1) // m) * m


def _dice_loss_kernel(logits_ref, labels_ref, out_ref, *, n_valid, tile_n):
    i = pl.program_id(0)

    x = logits_ref[...].astype(jnp.float32)                  # (tile_n, C) f32 in VMEM
    labels = labels_ref[...]                                  # (tile_n, 1) int32

    # Row-wise numerically stable softmax pieces over the class (lane) axis.
    m = jnp.max(x, axis=1, keepdims=True)                     # (tile_n, 1)
    e = jnp.exp(x - m)                                        # (tile_n, C)
    denom = jnp.sum(e, axis=1, keepdims=True)                 # (tile_n, 1)

    # "Gather" exp of the true class: compare against the column iota and masked-reduce
    # in one select (no one-hot temporary, no scalar gathers).
    col = jax.lax.broadcasted_iota(jnp.int32, x.shape, 1)     # (tile_n, C)
    pred_e = jnp.sum(jnp.where(col == labels, e, 0.0), axis=1, keepdims=True)

    pred_prob = pred_e * pl.reciprocal(denom, approx=False)   # (tile_n, 1)

    # Dice term.
    num = (1.0 - pred_prob) * pred_prob
    dsc = 1.0 - num * pl.reciprocal(num + 1.0, approx=False)  # (tile_n, 1)

    # Select (not multiply) away rows beyond the true batch size: the ragged last block
    # may contain garbage that became NaN/Inf through max/exp, and only a select keeps
    # that out of the partial sum.
    row = jax.lax.broadcasted_iota(jnp.int32, dsc.shape, 0) + i * tile_n
    dsc = jnp.where(row < n_valid, dsc, 0.0)

    out_ref[...] = jnp.sum(dsc).reshape(1, 1, 1)


def dice_loss(logits, labels, *, tile_n=None):
    """logits: (N, C) float (f32 or bf16); labels: (N,) int -> scalar mean dice loss."""
    n, c = logits.shape
    labels2d = labels.astype(jnp.int32).reshape(n, 1)

    # Byte-budget tile sizing (multiple of 8 rows).  Per-row VMEM working set:
    #   2 * C * itemsize      double-buffered logits input tile
    #   3 * C * 4             f32 intermediates (upcast x, e, masked e)
    #   2 * 128 * 4           lane-padded (tile_n, 1) int32 labels block, double-buffered
    itemsize = jnp.dtype(logits.dtype).itemsize
    per_row_bytes = 2 * c * itemsize + 3 * c * 4 + 2 * 128 * 4
    budget_bytes = 12 * 1024 * 1024          # comfortably inside 32 MiB scoped VMEM (v7x)
    cap = max(8, (budget_bytes // per_row_bytes) // 8 * 8)
    auto_tile = min(cap, _round_up(n, 8))
    tile_n = auto_tile if tile_n is None else max(8, min(tile_n, auto_tile))

    num_blocks = pl.cdiv(n, tile_n)          # ragged last block handled in-kernel

    partials = pl.pallas_call(
        functools.partial(_dice_loss_kernel, n_valid=n, tile_n=tile_n),
        out_shape=jax.ShapeDtypeStruct((num_blocks, 1, 1), jnp.float32),
        grid_spec=pltpu.PrefetchScalarGridSpec(
            num_scalar_prefetch=0,
            grid=(num_blocks,),
            in_specs=[
                pl.BlockSpec((tile_n, c), lambda i: (i, 0)),
                pl.BlockSpec((tile_n, 1), lambda i: (i, 0)),
            ],
            out_specs=pl.BlockSpec((1, 1, 1), lambda i: (i, 0, 0)),
        ),
        compiler_params=pltpu.CompilerParams(
            # Independent per-tile partials -> parallel axis (2-TC sharding on v7x).
            dimension_semantics=("parallel",),
            vmem_limit_bytes=32 * 1024 * 1024,
        ),
    )(logits, labels2d)

    return jnp.sum(partials) / jnp.float32(n)


def _dice_loss_ref(logits, labels):
    # Pure-JAX reference mirroring the PyTorch module.
    p = jax.nn.softmax(logits.astype(jnp.float32), axis=1)
    pp = jnp.take_along_axis(p, labels[:, None].astype(jnp.int32), axis=1)
    num = (1.0 - pp) * pp
    dsc = 1.0 - num / (num + 1.0)
    return jnp.mean(dsc)


if __name__ == "__main__":
    key = jax.random.PRNGKey(0)
    k1, k2, k3, k4 = jax.random.split(key, 4)

    # Small case consistent with the module: batch=8, num_classes=32 (single tile).
    N, C = 8, 32
    logits = jax.random.normal(k1, (N, C), dtype=jnp.float32)
    labels = jax.random.randint(k2, (N,), 0, C, dtype=jnp.int32)

    loss = dice_loss(logits, labels)
    jax.block_until_ready(loss)
    ref = _dice_loss_ref(logits, labels)
    assert jnp.allclose(loss, ref, atol=1e-5, rtol=1e-5), (loss, ref)

    # Multi-tile case exercising the parallel grid and the ragged last block:
    # N=300 rows, tile_n=64 -> grid=(5,), last block has 44 valid rows (no host-side pad).
    N2, C2 = 300, 128
    logits2 = jax.random.normal(k3, (N2, C2), dtype=jnp.float32)
    labels2 = jax.random.randint(k4, (N2,), 0, C2, dtype=jnp.int32)

    loss2 = dice_loss(logits2, labels2, tile_n=64)
    jax.block_until_ready(loss2)
    ref2 = _dice_loss_ref(logits2, labels2)
    assert jnp.allclose(loss2, ref2, atol=1e-5, rtol=1e-5), (loss2, ref2)

    print("KERNEL_OK")
</pallas_src>

<mosaic_0001>
module attributes {stable_mosaic.version = 11 : i64} {
  func.func @_dice_loss_kernel(%arg0: i32, %arg1: memref<8x32xf32, #tpu.memory_space<vmem>>, %arg2: memref<8x1xi32, #tpu.memory_space<vmem>>, %arg3: memref<1x1x1xf32, #tpu.memory_space<vmem>>) attributes {dimension_semantics = [#tpu.dimension_semantics<parallel>], iteration_bounds = array<i64: 1>, scalar_prefetch = 0 : i64, scratch_operands = 0 : i64, tpu.core_type = #tpu.core_type<tc>, window_params = [{transform_indices = @transform_0, window_bounds = array<i64: 8, 32>}, {transform_indices = @transform_1, window_bounds = array<i64: 8, 1>}, {transform_indices = @transform_2, window_bounds = array<i64: 1, 1, 1>}]} {
    %c0 = arith.constant 0 : index
    %c0_0 = arith.constant 0 : index
    %0 = vector.load %arg1[%c0, %c0_0] : memref<8x32xf32, #tpu.memory_space<vmem>>, vector<8x32xf32>
    %c0_1 = arith.constant 0 : index
    %c0_2 = arith.constant 0 : index
    %1 = vector.load %arg2[%c0_1, %c0_2] : memref<8x1xi32, #tpu.memory_space<vmem>>, vector<8x1xi32>
    %cst = arith.constant dense<0xFF800000> : vector<8xf32>
    %2 = vector.multi_reduction <maximumf>, %0, %cst [1] : vector<8x32xf32> to vector<8xf32>
    %3 = vector.shape_cast %2 : vector<8xf32> to vector<8x1xf32>
    %4 = vector.broadcast %3 : vector<8x1xf32> to vector<8x32xf32>
    %5 = arith.subf %0, %4 : vector<8x32xf32>
    %6 = math.exp %5 : vector<8x32xf32>
    %cst_3 = arith.constant dense<0.000000e+00> : vector<8xf32>
    %7 = vector.multi_reduction <add>, %6, %cst_3 [1] : vector<8x32xf32> to vector<8xf32>
    %8 = vector.shape_cast %7 : vector<8xf32> to vector<8x1xf32>
    %9 = tpu.iota {dimensions = array<i32: 1>} : vector<8x32xi32>
    %10 = vector.broadcast %1 : vector<8x1xi32> to vector<8x32xi32>
    %11 = arith.cmpi eq, %9, %10 : vector<8x32xi32>
    %cst_4 = arith.constant 0.000000e+00 : f32
    %12 = vector.broadcast %cst_4 : f32 to vector<8x32xf32>
    %13 = arith.select %11, %6, %12 : vector<8x32xi1>, vector<8x32xf32>
    %cst_5 = arith.constant dense<0.000000e+00> : vector<8xf32>
    %14 = vector.multi_reduction <add>, %13, %cst_5 [1] : vector<8x32xf32> to vector<8xf32>
    %15 = vector.shape_cast %14 : vector<8xf32> to vector<8x1xf32>
    %16 = tpu.reciprocal %8 : vector<8x1xf32> -> vector<8x1xf32>
    %17 = arith.mulf %15, %16 : vector<8x1xf32>
    %cst_6 = arith.constant 1.000000e+00 : f32
    %18 = vector.broadcast %cst_6 : f32 to vector<8x1xf32>
    %19 = arith.subf %18, %17 : vector<8x1xf32>
    %20 = arith.mulf %19, %17 : vector<8x1xf32>
    %cst_7 = arith.constant 1.000000e+00 : f32
    %21 = vector.broadcast %cst_7 : f32 to vector<8x1xf32>
    %22 = arith.addf %20, %21 : vector<8x1xf32>
    %23 = tpu.reciprocal %22 : vector<8x1xf32> -> vector<8x1xf32>
    %24 = arith.mulf %20, %23 : vector<8x1xf32>
    %cst_8 = arith.constant 1.000000e+00 : f32
    %25 = vector.broadcast %cst_8 : f32 to vector<8x1xf32>
    %26 = arith.subf %25, %24 : vector<8x1xf32>
    %27 = tpu.iota {dimensions = array<i32: 0>} : vector<8x1xi32>
    %c8_i32 = arith.constant 8 : i32
    %28 = arith.muli %arg0, %c8_i32 : i32
    %29 = vector.broadcast %28 : i32 to vector<8x1xi32>
    %30 = arith.addi %27, %29 : vector<8x1xi32>
    %c8_i32_9 = arith.constant 8 : i32
    %31 = vector.broadcast %c8_i32_9 : i32 to vector<8x1xi32>
    %32 = arith.cmpi slt, %30, %31 : vector<8x1xi32>
    %cst_10 = arith.constant 0.000000e+00 : f32
    %33 = vector.broadcast %cst_10 : f32 to vector<8x1xf32>
    %34 = arith.select %32, %26, %33 : vector<8x1xi1>, vector<8x1xf32>
    %35 = vector.shape_cast %34 : vector<8x1xf32> to vector<1x8x1xf32>
    %cst_11 = arith.constant dense<0.000000e+00> : vector<1xf32>
    %36 = vector.multi_reduction <add>, %35, %cst_11 [1, 2] : vector<1x8x1xf32> to vector<1xf32>
    %37 = vector.shape_cast %36 : vector<1xf32> to vector<1x1x1xf32>
    %38 = vector.extract %37[0, 0, 0] : f32 from vector<1x1x1xf32>
    %39 = vector.broadcast %38 : f32 to vector<1x1x1xf32>
    %c0_12 = arith.constant 0 : index
    %c0_13 = arith.constant 0 : index
    %c0_14 = arith.constant 0 : index
    %40 = vector.load %arg3[%c0_12, %c0_13, %c0_14] : memref<1x1x1xf32, #tpu.memory_space<vmem>>, vector<1x1x1xf32>
    tpu.vector_store %arg3[%c0_12, %c0_13, %c0_14], %39 {strides = array<i32>} : memref<1x1x1xf32, #tpu.memory_space<vmem>>, vector<1x1x1xf32>,
    return
  }
  func.func @transform_0(%arg0: i32) -> (i32, i32) {
    %c0_i32 = arith.constant 0 : i32
    %c0_i32_0 = arith.constant 0 : i32
    return %arg0, %c0_i32 : i32, i32
  }
  func.func @transform_1(%arg0: i32) -> (i32, i32) {
    %c0_i32 = arith.constant 0 : i32
    %c0_i32_0 = arith.constant 0 : i32
    return %arg0, %c0_i32 : i32, i32
  }
  func.func @transform_2(%arg0: i32) -> (i32, i32, i32) {
    %c0_i32 = arith.constant 0 : i32
    %c0_i32_0 = arith.constant 0 : i32
    %c0_i32_1 = arith.constant 0 : i32
    return %arg0, %c0_i32, %c0_i32_0 : i32, i32, i32
  }
}

</mosaic_0001>

<llo_original>
// kernel: tpu_custom_call.1
$region0: #{tpu_custom_call.1}
  #allocation0 [shape = 'u32[]', space=smem, size = 0x4, offset = 0x4, fixed_abs, tag = 'smem constant byte address 0x4 - core index']
  #allocation1 [shape = 'u32[72,128]{1,0:T(1,128)}', space=vmem, size = 0x9000, scoped, tag = 'internal scratch']
  %s0 = inlined_call_operand.vmem [shape: f32[8,32], index: 0, kind: input, shape index: {}]
  %s1 = inlined_call_operand.vmem [shape: s32[8,1], index: 1, kind: input, shape index: {}]
  %s2 = inlined_call_operand.hbm [shape: f32[1,1,1], index: 2, kind: output, shape index: {}]
  %s3 = sld [smem:[#allocation0]]
  $region18: #{tpu_custom_call.1} parent=0
    _
  %s5 = ssub.s32 1, %s3
  %s6 = scalar_select 0, %s5, %s3
  $region1: #{tpu_custom_call.1} parent=0
    #allocation2 [shape = 'u8[512]{0}', space=vmem, size = 0x400, scoped, tag = 'output window, operand 0, single buffered']
    #allocation3 [shape = 's32[1]{0}', space=sflag, size = 0x4, scoped, tag = 'scoped memory for tpu_custom_call.1']
    %7 = vsyncpa [#allocation3], 0
    // Predicated region
    $region2: #{tpu_custom_call.1} parent=1 // pred_check
      _
    $region3: #{tpu_custom_call.1} parent=1 // pred_check_branch
      %9 = sbr.rel (0) target = $region5
    $region4: #{tpu_custom_call.1} parent=1 // pred_region
      _
    $region5: #{tpu_custom_call.1} parent=1 // pred_fallthru
      _
    // Predicated region
    $region6: #{tpu_custom_call.1} parent=1 // pred_check
      _
    $region7: #{tpu_custom_call.1} parent=1 // pred_check_branch
      %11 = sbr.rel (0) target = $region9
    $region8: #{tpu_custom_call.1} parent=1 // pred_region
      _
    $region9: #{tpu_custom_call.1} parent=1 // pred_fallthru
      _
    %v12 = vld [vmem:[%s0] sm:$0xff]
    %v13 = vld [vmem:[%s1] sm:$0xff]
    %vm14 = vcmask 261120
    %v15 = vsel %vm14, %v12, -inf
    %16 = vmax.xlane.f32.xlu0 %v15
    %v17 = vpop.xlane.xlu0 %16
    %v18 = vsub.f32 %v12, %v17
    %v19 = vmul.f32 %v18, 1.442695
    %v20 = vpow.pop %v19
    %v21 = vsel %vm14, %v20, 0.0
    %22 = vadd.xlane.f32.xlu0 %v21
    %v23 = vpop.xlane.xlu0 %22
    %v24 = vlaneseq
    %v25 = vand.u32 %v24, 127
    %26 = vset.pattern.permute.xlu0 0
    %27 = vperm.xlu0 %26, %v13
    %v28 = vpop.permute.xlu0 %27
    %vm29 = vcmp.eq.s32.totalorder %v25, %v28
    %v30 = vsel %vm29, %v20, 0.0
    %v31 = vsel %vm14, %v30, 0.0
    %32 = vadd.xlane.f32.xlu0 %v31
    %v33 = vpop.xlane.xlu0 %32
    %v34 = vrcp.pop %v23
    %v35 = vmul.f32 %v23, %v34
    %v36 = vsub.f32 1.0, %v35
    %v37 = vmul.f32 %v34, %v36
    %v38 = vadd.f32 %v34, %v37
    %vm39 = vweird.f32 %v23
    %vm40 = vweird.f32 %v34
    %vm41 = vmor %vm39, %vm40
    %v42 = vsel %vm41, %v34, %v38
    %v43 = vand.u32 2147483647, %v23
    %vm44 = vcmp.eq.f32.partialorder %v43, 8.507059e+37
    %v45 = vand.u32 %v23, 2147483648
    %v46 = vor.u32 1.1754944e-38, %v45
    %v47 = vsel %vm44, %v46, %v42
    %v48 = vmul.f32 %v33, %v47
    %v49 = vsub.f32 1.0, %v48
    %v50 = vmul.f32 %v49, %v48
    %v51 = vadd.f32 %v50, 1.0
    %v52 = vrcp.pop %v51
    %v53 = vmul.f32 %v51, %v52
    %v54 = vsub.f32 1.0, %v53
    %v55 = vmul.f32 %v52, %v54
    %v56 = vadd.f32 %v52, %v55
    %vm57 = vweird.f32 %v51
    %vm58 = vweird.f32 %v52
    %vm59 = vmor %vm57, %vm58
    %v60 = vsel %vm59, %v52, %v56
    %v61 = vand.u32 2147483647, %v51
    %vm62 = vcmp.eq.f32.partialorder %v61, 8.507059e+37
    %v63 = vand.u32 %v51, 2147483648
    %v64 = vor.u32 1.1754944e-38, %v63
    %v65 = vsel %vm62, %v64, %v60
    %v66 = vmul.f32 %v50, %v65
    %v67 = vsub.f32 1.0, %v66
    %v68 = vlaneseq
    %v69 = vshrl.u32 %v68, 7
    %s70 = smul.u32 0, 8
    %v71 = vstv %s70
    %v72 = vadd.s32 %v69, %v71
    %vm73 = vcmp.lt.s32.totalorder %v72, 8
    %v74 = vsel %vm73, %v67, 0.0
    %vm75 = vcmask 7168
    %v76 = vsel %vm75, %v74, 0.0
    %77 = vadd.xlane.f32.xlu0 %v76
    %v78 = vpop.xlane.xlu0 %77
    %v79 = vrot.slane %v78, 4
    %v80 = vadd.f32 %v78, %v79
    %v81 = vrot.slane %v80, 2
    %v82 = vadd.f32 %v80, %v81
    %v83 = vrot.slane %v82, 1
    %v84 = vadd.f32 %v82, %v83
    %s85 = vtos %v84
    %v86 = vstv %s85
    %vm87 = vcmask 0
    %88 = vst.msk [vmem:[#allocation2] sm:$0x1] %vm87, %v86
    // Predicated region
    $region10: #{tpu_custom_call.1} parent=1 // pred_check
      _
    $region11: #{tpu_custom_call.1} parent=1 // pred_check_branch
      %90 = sbr.rel (0) target = $region13
    $region12: #{tpu_custom_call.1} parent=1 // pred_region
      %92 = vsyncadd [#allocation3], 0
      %s94 = sshll.u32 [#allocation2], 4
      %s95 = int_to_ptr.vmem [resolvable:$true] %s94
      %s96 = sshll.u32 %s2, 4
      %s97 = int_to_ptr.hbm [resolvable:$true] %s96
      %99 = dma.vmem_to_hbm [thread:$0]  %s95, 16, %s97, [#allocation3]
    $region13: #{tpu_custom_call.1} parent=1 // pred_fallthru
      _
    // Predicated region
    $region14: #{tpu_custom_call.1} parent=1 // pred_check
      _
    $region15: #{tpu_custom_call.1} parent=1 // pred_check_branch
      %101 = sbr.rel (0) target = $region17
    $region16: #{tpu_custom_call.1} parent=1 // pred_region
      %103 = dma.done [#allocation3], 16
    $region17: #{tpu_custom_call.1} parent=1 // pred_fallthru
      _
    %104 = vsyncpa [#allocation3], 1

</llo_original>
